<compile_context>
chip_gen: v7x
topology: tpu7x:2x2x1
jax: 0.10.0
libtpu: 0.0.40
codegen_flags: <defaults>
</compile_context>

<pallas_src>
import functools

import jax
import jax.numpy as jnp
from jax.experimental import pallas as pl
from jax.experimental.pallas import tpu as pltpu

_LANE = 128      # f32 lane tiling
_SUBLANE = 8     # f32 sublane tiling

# Conservative VMEM budgets (bytes), valid on v5e / v6e / v7x.
_FAST_PATH_BUDGET = 12 * 1024 * 1024   # whole-problem-resident path (< 16 MiB v5e default)
_GRID_BUDGET = 20 * 1024 * 1024        # pipelined x/out buffers on the grid path
_MAX_BLOCK_B = 8192                    # per-step DMA already in the low-MB range
_VMEM_LIMIT_CAP = 60 * 1024 * 1024     # stay under v7x's 64 MiB physical VMEM


def _round_up(x, m):
    return (x + m - 1) // m * m


def _linear_logsoftmax_kernel(x_ref, wt_ref, b_ref, o_ref):
    # logits = x @ W^T + b ; wt_ref holds W pre-transposed to (D, C), so the
    # MXU contraction is a plain (TB, D) @ (D, C) with no in-kernel transpose.
    logits = jnp.dot(x_ref[...], wt_ref[...],
                     preferred_element_type=jnp.float32) + b_ref[...]

    # Numerically-stable log-softmax over the class (lane) axis with a fused
    # epilogue: a single (TB, C) subtract on the output path.
    m = jnp.max(logits, axis=-1, keepdims=True)
    sum_exp = jnp.sum(jnp.exp(logits - m), axis=-1, keepdims=True)
    lse_total = m + jnp.log(sum_exp)
    o_ref[...] = (logits - lse_total).astype(o_ref.dtype)


@functools.partial(jax.jit, static_argnames=("block_b",))
def linear_logsoftmax(x, weight, bias, *, block_b=None):
    """x: (B, D); weight: (C, D) (PyTorch nn.Linear layout); bias: (C,)."""
    B, D = x.shape
    C = weight.shape[0]

    # One-time (per call) transpose of the small (C, D) weight -> (D, C); this
    # amortizes over every grid step instead of re-transposing the resident
    # weight tile on each step.
    wt = weight.T
    b2 = bias.reshape(1, C)

    # Lane-padded byte sizes: what tiles actually occupy in VMEM.
    d_pad = _round_up(D, _LANE)
    c_pad = _round_up(C, _LANE)
    resident_bytes = _round_up(D, _SUBLANE) * c_pad * 4 + _SUBLANE * c_pad * 4

    def _fast_call():
        # Whole problem resident in VMEM: no grid, no pipeline machinery.
        return pl.pallas_call(
            _linear_logsoftmax_kernel,
            out_shape=jax.ShapeDtypeStruct((B, C), jnp.float32),
        )(x, wt, b2)

    if block_b is None:
        rows_pad = _round_up(B, _SUBLANE)
        fast_bytes = rows_pad * (d_pad + c_pad) * 4 + resident_bytes
        if fast_bytes <= _FAST_PATH_BUDGET:
            return _fast_call()
        # Pick the largest batch tile that fits the (double-buffered) grid
        # budget, capped so per-step DMAs stay reasonable and so there are at
        # least two grid steps (keeps both v7x TensorCores busy).
        per_row_bytes = 2 * (d_pad + c_pad) * 4          # x + out, 2 buffers each
        by_vmem = (_GRID_BUDGET - resident_bytes) // per_row_bytes
        by_vmem = max(_SUBLANE, (by_vmem // _SUBLANE) * _SUBLANE)
        by_split = _round_up(pl.cdiv(B, 2), _SUBLANE)     # nb >= 2
        block_b = max(_SUBLANE, min(_MAX_BLOCK_B, by_vmem, by_split))
    elif B <= block_b:
        return _fast_call()

    assert block_b % _SUBLANE == 0 or block_b == B, \
        "block_b must be a multiple of 8 (f32 sublane tiling) or equal to B"

    nb = pl.cdiv(B, block_b)

    # Scoped-VMEM limit sized from the actual (lane-padded) footprint with
    # headroom; never below the v5e default, never near v7x physical VMEM.
    footprint = 2 * block_b * (d_pad + c_pad) * 4 + resident_bytes
    vmem_limit = min(max(2 * footprint + (4 << 20), 16 << 20), _VMEM_LIMIT_CAP)

    # Ragged last block (B % block_b != 0) is handled by Pallas: OOB reads are
    # padded, OOB writes masked. Padded rows only produce garbage in their own
    # rows (no cross-row reduction), so nothing wrong is ever written.
    return pl.pallas_call(
        _linear_logsoftmax_kernel,
        out_shape=jax.ShapeDtypeStruct((B, C), jnp.float32),
        grid=(nb,),
        in_specs=[
            pl.BlockSpec((block_b, D), lambda i: (i, 0)),
            pl.BlockSpec((D, C), lambda i: (0, 0)),   # weight resident in VMEM
            pl.BlockSpec((1, C), lambda i: (0, 0)),   # bias resident in VMEM
        ],
        out_specs=pl.BlockSpec((block_b, C), lambda i: (i, 0)),
        compiler_params=pltpu.CompilerParams(
            dimension_semantics=("parallel",),
            vmem_limit_bytes=int(vmem_limit)),
    )(x, wt, b2)


if __name__ == "__main__":
    # Small shapes consistent with the module: batch=8, input_dim=32, nclass=16.
    B, D, C = 8, 32, 16
    key = jax.random.PRNGKey(0)
    kx, kw, kb = jax.random.split(key, 3)

    x = jax.random.normal(kx, (B, D), dtype=jnp.float32)

    # Deterministic parameter init mirroring nn.Linear's default:
    # U(-1/sqrt(input_dim), 1/sqrt(input_dim)).
    bound = 1.0 / jnp.sqrt(jnp.float32(D))
    weight = jax.random.uniform(kw, (C, D), dtype=jnp.float32,
                                minval=-bound, maxval=bound)
    bias = jax.random.uniform(kb, (C,), dtype=jnp.float32,
                              minval=-bound, maxval=bound)

    # Path 1: whole-problem-resident (no-grid) fast path.
    out = linear_logsoftmax(x, weight, bias)
    jax.block_until_ready(out)
    ref = jax.nn.log_softmax(x @ weight.T + bias, axis=1)
    assert jnp.allclose(out, ref, atol=1e-5, rtol=1e-5), "mismatch (no-grid path)"

    # Path 2: batch-tiled grid path with a ragged last block (B=20, block_b=8
    # -> 3 grid steps, last one masked) to exercise the pipelined variant and
    # the pad/slice-free ragged handling.
    x2 = jax.random.normal(jax.random.PRNGKey(1), (20, D), dtype=jnp.float32)
    out2 = linear_logsoftmax(x2, weight, bias, block_b=8)
    jax.block_until_ready(out2)
    ref2 = jax.nn.log_softmax(x2 @ weight.T + bias, axis=1)
    assert jnp.allclose(out2, ref2, atol=1e-5, rtol=1e-5), "mismatch (tiled path)"

    print("KERNEL_OK")
</pallas_src>

<mosaic_0001>
module attributes {stable_mosaic.version = 11 : i64} {
  func.func @_linear_logsoftmax_kernel(%arg0: memref<8x32xf32, #tpu.memory_space<vmem>>, %arg1: memref<32x16xf32, #tpu.memory_space<vmem>>, %arg2: memref<1x16xf32, #tpu.memory_space<vmem>>, %arg3: memref<8x16xf32, #tpu.memory_space<vmem>>) attributes {dimension_semantics = [], scalar_prefetch = 0 : i64, scratch_operands = 0 : i64, tpu.core_type = #tpu.core_type<tc>} {
    %c0 = arith.constant 0 : index
    %c0_0 = arith.constant 0 : index
    %0 = vector.load %arg0[%c0, %c0_0] : memref<8x32xf32, #tpu.memory_space<vmem>>, vector<8x32xf32>
    %c0_1 = arith.constant 0 : index
    %c0_2 = arith.constant 0 : index
    %1 = vector.load %arg1[%c0_1, %c0_2] : memref<32x16xf32, #tpu.memory_space<vmem>>, vector<32x16xf32>
    %cst = arith.constant dense<0.000000e+00> : vector<8x16xf32>
    %2 = tpu.matmul %0, %1, %cst {dimension_numbers = #tpu.dot_dimension_numbers<[1], [0], [0], [1], [0, 0, 1, 1], [], []>} : vector<8x32xf32>, vector<32x16xf32>, vector<8x16xf32> -> vector<8x16xf32>
    %c0_3 = arith.constant 0 : index
    %c0_4 = arith.constant 0 : index
    %3 = vector.load %arg2[%c0_3, %c0_4] : memref<1x16xf32, #tpu.memory_space<vmem>>, vector<1x16xf32>
    %4 = vector.broadcast %3 : vector<1x16xf32> to vector<8x16xf32>
    %5 = arith.addf %2, %4 : vector<8x16xf32>
    %cst_5 = arith.constant dense<0xFF800000> : vector<8xf32>
    %6 = vector.multi_reduction <maximumf>, %5, %cst_5 [1] : vector<8x16xf32> to vector<8xf32>
    %7 = vector.shape_cast %6 : vector<8xf32> to vector<8x1xf32>
    %8 = vector.broadcast %7 : vector<8x1xf32> to vector<8x16xf32>
    %9 = arith.subf %5, %8 : vector<8x16xf32>
    %10 = math.exp %9 : vector<8x16xf32>
    %cst_6 = arith.constant dense<0.000000e+00> : vector<8xf32>
    %11 = vector.multi_reduction <add>, %10, %cst_6 [1] : vector<8x16xf32> to vector<8xf32>
    %12 = vector.shape_cast %11 : vector<8xf32> to vector<8x1xf32>
    %13 = math.log %12 : vector<8x1xf32>
    %14 = arith.addf %7, %13 : vector<8x1xf32>
    %15 = vector.broadcast %14 : vector<8x1xf32> to vector<8x16xf32>
    %16 = arith.subf %5, %15 : vector<8x16xf32>
    %c0_7 = arith.constant 0 : index
    %c0_8 = arith.constant 0 : index
    %17 = vector.load %arg3[%c0_7, %c0_8] : memref<8x16xf32, #tpu.memory_space<vmem>>, vector<8x16xf32>
    tpu.vector_store %arg3[%c0_7, %c0_8], %16 {strides = array<i32>} : memref<8x16xf32, #tpu.memory_space<vmem>>, vector<8x16xf32>,
    return
  }
}

</mosaic_0001>

<llo_original>
// kernel: linear_logsoftmax.1
$region0: #{linear_logsoftmax.1}
  #allocation0 [shape = 'u32[]', space=smem, size = 0x4, offset = 0x4, fixed_abs, tag = 'smem constant byte address 0x4 - core index']
  #allocation1 [shape = 'u32[144,128]{1,0:T(1,128)}', space=vmem, size = 0x12000, scoped, tag = 'internal scratch']
  %s0 = inlined_call_operand.vmem [shape: f32[8,32], index: 0, kind: input, shape index: {}]
  %s1 = inlined_call_operand.vmem [shape: f32[32,16], index: 1, kind: input, shape index: {}]
  %s2 = inlined_call_operand.vmem [shape: f32[1,16], index: 2, kind: input, shape index: {}]
  %s3 = inlined_call_operand.hbm [shape: f32[8,16], index: 3, kind: output, shape index: {}]
  %s4 = sld [smem:[#allocation0]]
  $region22: #{linear_logsoftmax.1} parent=0
    _
  %s6 = ssub.s32 1, %s4
  %s7 = scalar_select 0, %s6, %s4
  $region1: #{linear_logsoftmax.1} parent=0
    #allocation2 [shape = 'u8[4096]{0}', space=vmem, size = 0x1000, scoped, tag = 'output window, operand 0, single buffered']
    #allocation3 [shape = 's32[1]{0}', space=sflag, size = 0x4, scoped, tag = 'scoped memory for linear_logsoftmax.1']
    %8 = vsyncpa [#allocation3], 0
    // Predicated region
    $region2: #{linear_logsoftmax.1} parent=1 // pred_check
      _
    $region3: #{linear_logsoftmax.1} parent=1 // pred_check_branch
      %10 = sbr.rel (0) target = $region5
    $region4: #{linear_logsoftmax.1} parent=1 // pred_region
      _
    $region5: #{linear_logsoftmax.1} parent=1 // pred_fallthru
      _
    // Predicated region
    $region6: #{linear_logsoftmax.1} parent=1 // pred_check
      _
    $region7: #{linear_logsoftmax.1} parent=1 // pred_check_branch
      %12 = sbr.rel (0) target = $region9
    $region8: #{linear_logsoftmax.1} parent=1 // pred_region
      _
    $region9: #{linear_logsoftmax.1} parent=1 // pred_fallthru
      _
    // Predicated region
    $region10: #{linear_logsoftmax.1} parent=1 // pred_check
      _
    $region11: #{linear_logsoftmax.1} parent=1 // pred_check_branch
      %14 = sbr.rel (0) target = $region13
    $region12: #{linear_logsoftmax.1} parent=1 // pred_region
      _
    $region13: #{linear_logsoftmax.1} parent=1 // pred_fallthru
      _
    %v15 = vld [vmem:[%s0] sm:$0xff]
    %v16 = vld [vmem:[%s1] sm:$0xff]
    %v17 = vld [vmem:[%s1 + $0x8] sm:$0xff]
    %v18 = vld [vmem:[%s1 + $0x10] sm:$0xff]
    %v19 = vld [vmem:[%s1 + $0x18] sm:$0xff]
    %v20 = vld [vmem:[%s2] sm:$0x1]
    %v22 = vlaneseq
    %v23 = vshrl.u32 %v22, 7
    %v24 = vsub.s32 0, %v23
    %v25 = vrot.slane %v20, %v24
    %vm27 = vcmask 261120
    %v29 = vsel %vm27, %v15, 0
    %31 = vmatprep.subr.mxu0 0.0
    %32 = vmatpush1.msra.mxu0 %v16
    %33 = vmatprep.subr.mxu0 0.0
    %34 = vmatpush1.msra.mxu0 %v17
    %35 = vmatprep.subr.mxu0 0.0
    %36 = vmatpush1.msra.mxu0 %v18
    %37 = vmatprep.subr.mxu0 0.0
    %38 = vmatpush1.msra.mxu0 %v19
    %39 = vmatprep.subr.mxu0 0.0
    %40 = vmatpush1.msra.mxu0 0.0
    %41 = vmatprep.subr.mxu0 0.0
    %42 = vmatpush1.msra.mxu0 0.0
    %43 = vmatprep.subr.mxu0 0.0
    %44 = vmatpush1.msra.mxu0 0.0
    %45 = vmatprep.subr.mxu0 0.0
    %46 = vmatpush1.msra.mxu0 0.0
    %47 = vmatprep.subr.mxu0 0.0
    %48 = vmatpush1.msra.mxu0 0.0
    %49 = vmatprep.subr.mxu0 0.0
    %50 = vmatpush1.msra.mxu0 0.0
    %51 = vmatprep.subr.mxu0 0.0
    %52 = vmatpush1.msra.mxu0 0.0
    %53 = vmatprep.subr.mxu0 0.0
    %54 = vmatpush1.msra.mxu0 0.0
    %55 = vmatprep.subr.mxu0 0.0
    %56 = vmatpush1.msra.mxu0 0.0
    %57 = vmatprep.subr.mxu0 0.0
    %58 = vmatpush1.msra.mxu0 0.0
    %59 = vmatprep.subr.mxu0 0.0
    %60 = vmatpush1.msra.mxu0 0.0
    %61 = vmatprep.subr.mxu0 0.0
    %62 = vmatpush1.msra.mxu0 0.0
    %63 = vmatprep.subr.mxu0 0.0
    %64 = vmatpush1.msra.mxu0 0.0
    %65 = vmatprep.subr.mxu0 0.0
    %66 = vmatpush1.msra.mxu0 0.0
    %67 = vmatprep.subr.mxu0 0.0
    %68 = vmatpush1.msra.mxu0 0.0
    %69 = vmatprep.subr.mxu0 0.0
    %70 = vmatpush1.msra.mxu0 0.0
    %71 = vmatprep.subr.mxu0 0.0
    %72 = vmatpush1.msra.mxu0 0.0
    %73 = vmatprep.subr.mxu0 0.0
    %74 = vmatpush1.msra.mxu0 0.0
    %75 = vmatprep.subr.mxu0 0.0
    %76 = vmatpush1.msra.mxu0 0.0
    %77 = vmatprep.subr.mxu0 0.0
    %78 = vmatpush1.msra.mxu0 0.0
    %79 = vmatprep.subr.mxu0 0.0
    %80 = vmatpush1.msra.mxu0 0.0
    %81 = vmatprep.subr.mxu0 0.0
    %82 = vmatpush1.msra.mxu0 0.0
    %83 = vmatprep.subr.mxu0 0.0
    %84 = vmatpush1.msra.mxu0 0.0
    %85 = vmatprep.subr.mxu0 0.0
    %86 = vmatpush1.msra.mxu0 0.0
    %87 = vmatprep.subr.mxu0 0.0
    %88 = vmatpush1.msra.mxu0 0.0
    %89 = vmatprep.subr.mxu0 0.0
    %90 = vmatpush1.msra.mxu0 0.0
    %91 = vmatprep.subr.mxu0 0.0
    %92 = vmatpush1.msra.mxu0 0.0
    %93 = vmatprep.subr.mxu0 0.0
    %94 = vmatpush1.msra.mxu0 0.0
    %95 = vmatprep.mubr.f32.mxu0 0.0
    %96 = vmatmul.mubr.f32.gmra.mrb[0].mxu0 %v29
    %v97 = vpop.f32.mrb[0].mxu0
    %v98 = vadd.f32 %v25, %v97
    %v99 = vpop.f32.mrb[0].mxu0
    %100 = vdwg.mxu0
    %vm101 = vcmask 130048
    %v102 = vsel %vm101, %v98, -inf
    %103 = vmax.xlane.f32.xlu0 %v102
    %v104 = vpop.xlane.xlu0 %103
    %v105 = vsub.f32 %v98, %v104
    %v106 = vmul.f32 %v105, 1.442695
    %v107 = vpow.pop %v106
    %v108 = vsel %vm101, %v107, 0.0
    %109 = vadd.xlane.f32.xlu0 %v108
    %v110 = vpop.xlane.xlu0 %109
    %v111 = vlog2.pop %v110
    %v112 = vmul.f32 %v111, 0.6931472
    %v113 = vadd.f32 %v104, %v112
    %v114 = vsub.f32 %v98, %v113
    %115 = vst.msk [vmem:[#allocation2] sm:$0xff] %vm101, %v114
    // Predicated region
    $region14: #{linear_logsoftmax.1} parent=1 // pred_check
      _
    $region15: #{linear_logsoftmax.1} parent=1 // pred_check_branch
      %117 = sbr.rel (0) target = $region17
    $region16: #{linear_logsoftmax.1} parent=1 // pred_region
      %s119 = ssub.s32 128, 128
      %120 = vsyncadd [#allocation3], %s119
      %s122 = sshll.u32 [#allocation2], 4
      %s123 = int_to_ptr.vmem [resolvable:$true] %s122
      %125 = dma.vmem_to_hbm [thread:$0]  %s123, 128, %s3, [#allocation3]
    $region17: #{linear_logsoftmax.1} parent=1 // pred_fallthru
      _
    // Predicated region
    $region18: #{linear_logsoftmax.1} parent=1 // pred_check
      _
    $region19: #{linear_logsoftmax.1} parent=1 // pred_check_branch
      %127 = sbr.rel (0) target = $region21
    $region20: #{linear_logsoftmax.1} parent=1 // pred_region
      %128 = dma.done [#allocation3], 128
    $region21: #{linear_logsoftmax.1} parent=1 // pred_fallthru
      _
    %129 = vsyncpa [#allocation3], 1

</llo_original>
